<compile_context>
chip_gen: v7x
topology: tpu7x:2x2x1
jax: 0.10.0
libtpu: 0.0.40
codegen_flags: <defaults>
</compile_context>

<pallas_src>
import math

import jax
import jax.numpy as jnp
from jax.experimental import pallas as pl
from jax.experimental.pallas import tpu as pltpu


# Largest batch handled by the no-grid single-tile path.
SINGLE_TILE_MAX_B = 512
# Upper bound on rows per batch tile in the grid path (1-2 MiB/stream at D=32).
MAX_BATCH_TILE = 2048


def _round_up(n, m):
    return ((n + m - 1) // m) * m


def mlp_kernel(x_ref, w1_ref, b1_ref, w2_ref, b2_ref, o_ref):
    # fc1: (Bt, D) @ (D, H) + (1, H), f32 accumulate on MXU.
    h = jnp.dot(x_ref[...], w1_ref[...], preferred_element_type=jnp.float32)
    # bias add + ReLU in f32 on the VPU.
    h = jnp.maximum(h + b1_ref[...], 0.0)
    # fc2: (Bt, H) @ (H, C) + (1, C). h stays f32 (exact PyTorch-f32 match).
    out = jnp.dot(h, w2_ref[...], preferred_element_type=jnp.float32)
    o_ref[...] = (out + b2_ref[...]).astype(o_ref.dtype)


def prepare_params(w1, b1, w2, b2):
    """One-time parameter prep: transpose PyTorch (out, in) Linear weights to
    (in, out) and reshape biases to (1, N). No padding anywhere — all weight /
    bias blocks are whole-array blocks, which is always a legal block shape."""
    w1_t = jnp.asarray(w1, jnp.float32).T          # (D, H)
    b1_p = jnp.asarray(b1, jnp.float32).reshape(1, -1)   # (1, H)
    w2_t = jnp.asarray(w2, jnp.float32).T          # (H, C)
    b2_p = jnp.asarray(b2, jnp.float32).reshape(1, -1)   # (1, C)
    return w1_t, b1_p, w2_t, b2_p


@jax.jit
def mlp_classifier(x, w1_t, b1_p, w2_t, b2_p):
    """Forward pass: x (B, D) f32 -> logits (B, C) f32 (C = num_classes)."""
    B, D = x.shape
    H = w1_t.shape[1]
    C = w2_t.shape[1]
    out_shape = jax.ShapeDtypeStruct((B, C), jnp.float32)

    if B <= SINGLE_TILE_MAX_B:
        # Single whole-array tile, no grid / pipelining bookkeeping at all.
        # Explicit VMEM placement for every operand and the output.
        vmem_spec = pl.BlockSpec(memory_space=pltpu.MemorySpace.VMEM)
        return pl.pallas_call(
            mlp_kernel,
            out_shape=out_shape,
            in_specs=[vmem_spec] * 5,
            out_specs=vmem_spec,
        )(x, w1_t, b1_p, w2_t, b2_p)

    # Grid path: tile only the batch axis. Tile sized from B, capped at
    # MAX_BATCH_TILE, and chosen so there are always >= 2 grid steps (so the
    # "parallel" axis shards across both v7x TensorCores). Ragged batches are
    # handled by the cdiv grid; no padding / trailing slice needed.
    tb = min(MAX_BATCH_TILE, _round_up((B + 1) // 2, 8))
    n_tiles = pl.cdiv(B, tb)
    return pl.pallas_call(
        mlp_kernel,
        out_shape=out_shape,
        grid=(n_tiles,),
        in_specs=[
            pl.BlockSpec((tb, D), lambda i: (i, 0)),   # x: batch-tiled
            pl.BlockSpec((D, H), lambda i: (0, 0)),    # weights/biases pinned
            pl.BlockSpec((1, H), lambda i: (0, 0)),    # at block (0,0): stay
            pl.BlockSpec((H, C), lambda i: (0, 0)),    # VMEM-resident across
            pl.BlockSpec((1, C), lambda i: (0, 0)),    # all batch tiles
        ],
        out_specs=pl.BlockSpec((tb, C), lambda i: (i, 0)),
        compiler_params=pltpu.CompilerParams(
            dimension_semantics=("parallel",),
            vmem_limit_bytes=32 * 1024 * 1024,
        ),
    )(x, w1_t, b1_p, w2_t, b2_p)


def xavier_uniform(key, shape, dtype=jnp.float32):
    # nn.init.xavier_uniform_ for a (fan_out, fan_in) Linear weight.
    fan_out, fan_in = shape
    limit = math.sqrt(6.0 / (fan_in + fan_out))
    return jax.random.uniform(key, shape, dtype, minval=-limit, maxval=limit)


def linear_bias_init(key, fan_in, n, dtype=jnp.float32):
    # PyTorch default Linear bias init: U(-1/sqrt(fan_in), 1/sqrt(fan_in)).
    bound = 1.0 / math.sqrt(fan_in)
    return jax.random.uniform(key, (n,), dtype, minval=-bound, maxval=bound)


if __name__ == "__main__":
    input_size, hidden_size, num_classes = 32, 64, 8
    batch = 4

    key = jax.random.PRNGKey(0)
    k_x, k_w1, k_b1, k_w2, k_b2, k_xl = jax.random.split(key, 6)

    x = jax.random.normal(k_x, (batch, input_size), jnp.float32)
    w1 = xavier_uniform(k_w1, (hidden_size, input_size))
    b1 = linear_bias_init(k_b1, input_size, hidden_size)
    w2 = xavier_uniform(k_w2, (num_classes, hidden_size))
    b2 = linear_bias_init(k_b2, hidden_size, num_classes)

    # One-time parameter prep (pre-transpose; no padding).
    params = prepare_params(w1, b1, w2, b2)

    # --- small batch (single-tile, no-grid path) ---
    out = mlp_classifier(x, *params)
    out = jax.block_until_ready(out)
    ref = jnp.maximum(x @ w1.T + b1, 0.0) @ w2.T + b2
    assert out.shape == (batch, num_classes)
    assert jnp.allclose(out, ref, atol=1e-5, rtol=1e-5)

    # --- larger batch (batch-tiled "parallel" grid path, ragged last tile) ---
    big_batch = 600  # > SINGLE_TILE_MAX_B -> 2 tiles of 304 rows (ragged)
    x_big = jax.random.normal(k_xl, (big_batch, input_size), jnp.float32)
    out_big = mlp_classifier(x_big, *params)
    out_big = jax.block_until_ready(out_big)
    ref_big = jnp.maximum(x_big @ w1.T + b1, 0.0) @ w2.T + b2
    assert out_big.shape == (big_batch, num_classes)
    assert jnp.allclose(out_big, ref_big, atol=1e-5, rtol=1e-5)

    print("KERNEL_OK")
</pallas_src>

<mosaic_0001>
module attributes {stable_mosaic.version = 11 : i64} {
  func.func @mlp_kernel(%arg0: memref<4x32xf32, #tpu.memory_space<vmem>>, %arg1: memref<32x64xf32, #tpu.memory_space<vmem>>, %arg2: memref<1x64xf32, #tpu.memory_space<vmem>>, %arg3: memref<64x8xf32, #tpu.memory_space<vmem>>, %arg4: memref<1x8xf32, #tpu.memory_space<vmem>>, %arg5: memref<4x8xf32, #tpu.memory_space<vmem>>) attributes {dimension_semantics = [], scalar_prefetch = 0 : i64, scratch_operands = 0 : i64, tpu.core_type = #tpu.core_type<tc>} {
    %c0 = arith.constant 0 : index
    %c0_0 = arith.constant 0 : index
    %0 = vector.load %arg0[%c0, %c0_0] : memref<4x32xf32, #tpu.memory_space<vmem>>, vector<4x32xf32>
    %c0_1 = arith.constant 0 : index
    %c0_2 = arith.constant 0 : index
    %1 = vector.load %arg1[%c0_1, %c0_2] : memref<32x64xf32, #tpu.memory_space<vmem>>, vector<32x64xf32>
    %cst = arith.constant dense<0.000000e+00> : vector<4x64xf32>
    %2 = tpu.matmul %0, %1, %cst {dimension_numbers = #tpu.dot_dimension_numbers<[1], [0], [0], [1], [0, 0, 1, 1], [], []>} : vector<4x32xf32>, vector<32x64xf32>, vector<4x64xf32> -> vector<4x64xf32>
    %c0_3 = arith.constant 0 : index
    %c0_4 = arith.constant 0 : index
    %3 = vector.load %arg2[%c0_3, %c0_4] : memref<1x64xf32, #tpu.memory_space<vmem>>, vector<1x64xf32>
    %4 = vector.broadcast %3 : vector<1x64xf32> to vector<4x64xf32>
    %5 = arith.addf %2, %4 : vector<4x64xf32>
    %cst_5 = arith.constant 0.000000e+00 : f32
    %6 = vector.broadcast %cst_5 : f32 to vector<4x64xf32>
    %7 = arith.maximumf %5, %6 : vector<4x64xf32>
    %c0_6 = arith.constant 0 : index
    %c0_7 = arith.constant 0 : index
    %8 = vector.load %arg3[%c0_6, %c0_7] : memref<64x8xf32, #tpu.memory_space<vmem>>, vector<64x8xf32>
    %cst_8 = arith.constant dense<0.000000e+00> : vector<4x8xf32>
    %9 = tpu.matmul %7, %8, %cst_8 {dimension_numbers = #tpu.dot_dimension_numbers<[1], [0], [0], [1], [0, 0, 1, 1], [], []>} : vector<4x64xf32>, vector<64x8xf32>, vector<4x8xf32> -> vector<4x8xf32>
    %c0_9 = arith.constant 0 : index
    %c0_10 = arith.constant 0 : index
    %10 = vector.load %arg4[%c0_9, %c0_10] : memref<1x8xf32, #tpu.memory_space<vmem>>, vector<1x8xf32>
    %11 = vector.broadcast %10 : vector<1x8xf32> to vector<4x8xf32>
    %12 = arith.addf %9, %11 : vector<4x8xf32>
    %c0_11 = arith.constant 0 : index
    %c0_12 = arith.constant 0 : index
    %13 = vector.load %arg5[%c0_11, %c0_12] : memref<4x8xf32, #tpu.memory_space<vmem>>, vector<4x8xf32>
    tpu.vector_store %arg5[%c0_11, %c0_12], %12 {strides = array<i32>} : memref<4x8xf32, #tpu.memory_space<vmem>>, vector<4x8xf32>,
    return
  }
}

</mosaic_0001>

<llo_original>
// kernel: mlp_classifier.1
$region0: #{mlp_classifier.1}
  #allocation0 [shape = 'u32[]', space=smem, size = 0x4, offset = 0x4, fixed_abs, tag = 'smem constant byte address 0x4 - core index']
  #allocation1 [shape = 'u32[144,128]{1,0:T(1,128)}', space=vmem, size = 0x12000, scoped, tag = 'internal scratch']
  %s0 = inlined_call_operand.vmem [shape: f32[4,32], index: 0, kind: input, shape index: {}]
  %s1 = inlined_call_operand.vmem [shape: f32[32,64], index: 1, kind: input, shape index: {}]
  %s2 = inlined_call_operand.vmem [shape: f32[1,64], index: 2, kind: input, shape index: {}]
  %s3 = inlined_call_operand.vmem [shape: f32[64,8], index: 3, kind: input, shape index: {}]
  %s4 = inlined_call_operand.vmem [shape: f32[1,8], index: 4, kind: input, shape index: {}]
  %s5 = inlined_call_operand.hbm [shape: f32[4,8], index: 5, kind: output, shape index: {}]
  %s6 = sld [smem:[#allocation0]]
  $region30: #{mlp_classifier.1} parent=0
    _
  %s8 = ssub.s32 1, %s6
  %s9 = scalar_select 0, %s8, %s6
  $region1: #{mlp_classifier.1} parent=0
    #allocation2 [shape = 'u8[2048]{0}', space=vmem, size = 0x800, scoped, tag = 'output window, operand 0, single buffered']
    #allocation3 [shape = 's32[1]{0}', space=sflag, size = 0x4, scoped, tag = 'scoped memory for mlp_classifier.1']
    %10 = vsyncpa [#allocation3], 0
    // Predicated region
    $region2: #{mlp_classifier.1} parent=1 // pred_check
      _
    $region3: #{mlp_classifier.1} parent=1 // pred_check_branch
      %12 = sbr.rel (0) target = $region5
    $region4: #{mlp_classifier.1} parent=1 // pred_region
      _
    $region5: #{mlp_classifier.1} parent=1 // pred_fallthru
      _
    // Predicated region
    $region6: #{mlp_classifier.1} parent=1 // pred_check
      _
    $region7: #{mlp_classifier.1} parent=1 // pred_check_branch
      %14 = sbr.rel (0) target = $region9
    $region8: #{mlp_classifier.1} parent=1 // pred_region
      _
    $region9: #{mlp_classifier.1} parent=1 // pred_fallthru
      _
    // Predicated region
    $region10: #{mlp_classifier.1} parent=1 // pred_check
      _
    $region11: #{mlp_classifier.1} parent=1 // pred_check_branch
      %16 = sbr.rel (0) target = $region13
    $region12: #{mlp_classifier.1} parent=1 // pred_region
      _
    $region13: #{mlp_classifier.1} parent=1 // pred_fallthru
      _
    // Predicated region
    $region14: #{mlp_classifier.1} parent=1 // pred_check
      _
    $region15: #{mlp_classifier.1} parent=1 // pred_check_branch
      %18 = sbr.rel (0) target = $region17
    $region16: #{mlp_classifier.1} parent=1 // pred_region
      _
    $region17: #{mlp_classifier.1} parent=1 // pred_fallthru
      _
    // Predicated region
    $region18: #{mlp_classifier.1} parent=1 // pred_check
      _
    $region19: #{mlp_classifier.1} parent=1 // pred_check_branch
      %20 = sbr.rel (0) target = $region21
    $region20: #{mlp_classifier.1} parent=1 // pred_region
      _
    $region21: #{mlp_classifier.1} parent=1 // pred_fallthru
      _
    %v21 = vld [vmem:[%s0] sm:$0xf]
    %v22 = vld [vmem:[%s1] sm:$0xff]
    %v23 = vld [vmem:[%s1 + $0x8] sm:$0xff]
    %v24 = vld [vmem:[%s1 + $0x10] sm:$0xff]
    %v25 = vld [vmem:[%s1 + $0x18] sm:$0xff]
    %v26 = vld [vmem:[%s2] sm:$0x1]
    %v28 = vlaneseq
    %v29 = vshrl.u32 %v28, 7
    %v30 = vsub.s32 0, %v29
    %v31 = vrot.slane %v26, %v30
    %vm33 = vcmask 261120
    %v35 = vsel %vm33, %v21, 0
    %37 = vmatprep.subr.mxu0 0.0
    %38 = vmatpush1.msra.mxu0 %v22
    %39 = vmatprep.subr.mxu0 0.0
    %40 = vmatpush1.msra.mxu0 %v23
    %41 = vmatprep.subr.mxu0 0.0
    %42 = vmatpush1.msra.mxu0 %v24
    %43 = vmatprep.subr.mxu0 0.0
    %44 = vmatpush1.msra.mxu0 %v25
    %45 = vmatprep.subr.mxu0 0.0
    %46 = vmatpush1.msra.mxu0 0.0
    %47 = vmatprep.subr.mxu0 0.0
    %48 = vmatpush1.msra.mxu0 0.0
    %49 = vmatprep.subr.mxu0 0.0
    %50 = vmatpush1.msra.mxu0 0.0
    %51 = vmatprep.subr.mxu0 0.0
    %52 = vmatpush1.msra.mxu0 0.0
    %53 = vmatprep.subr.mxu0 0.0
    %54 = vmatpush1.msra.mxu0 0.0
    %55 = vmatprep.subr.mxu0 0.0
    %56 = vmatpush1.msra.mxu0 0.0
    %57 = vmatprep.subr.mxu0 0.0
    %58 = vmatpush1.msra.mxu0 0.0
    %59 = vmatprep.subr.mxu0 0.0
    %60 = vmatpush1.msra.mxu0 0.0
    %61 = vmatprep.subr.mxu0 0.0
    %62 = vmatpush1.msra.mxu0 0.0
    %63 = vmatprep.subr.mxu0 0.0
    %64 = vmatpush1.msra.mxu0 0.0
    %65 = vmatprep.subr.mxu0 0.0
    %66 = vmatpush1.msra.mxu0 0.0
    %67 = vmatprep.subr.mxu0 0.0
    %68 = vmatpush1.msra.mxu0 0.0
    %69 = vmatprep.subr.mxu0 0.0
    %70 = vmatpush1.msra.mxu0 0.0
    %71 = vmatprep.subr.mxu0 0.0
    %72 = vmatpush1.msra.mxu0 0.0
    %73 = vmatprep.subr.mxu0 0.0
    %74 = vmatpush1.msra.mxu0 0.0
    %75 = vmatprep.subr.mxu0 0.0
    %76 = vmatpush1.msra.mxu0 0.0
    %77 = vmatprep.subr.mxu0 0.0
    %78 = vmatpush1.msra.mxu0 0.0
    %79 = vmatprep.subr.mxu0 0.0
    %80 = vmatpush1.msra.mxu0 0.0
    %81 = vmatprep.subr.mxu0 0.0
    %82 = vmatpush1.msra.mxu0 0.0
    %83 = vmatprep.subr.mxu0 0.0
    %84 = vmatpush1.msra.mxu0 0.0
    %85 = vmatprep.subr.mxu0 0.0
    %86 = vmatpush1.msra.mxu0 0.0
    %87 = vmatprep.subr.mxu0 0.0
    %88 = vmatpush1.msra.mxu0 0.0
    %89 = vmatprep.subr.mxu0 0.0
    %90 = vmatpush1.msra.mxu0 0.0
    %91 = vmatprep.subr.mxu0 0.0
    %92 = vmatpush1.msra.mxu0 0.0
    %93 = vmatprep.subr.mxu0 0.0
    %94 = vmatpush1.msra.mxu0 0.0
    %95 = vmatprep.subr.mxu0 0.0
    %96 = vmatpush1.msra.mxu0 0.0
    %97 = vmatprep.subr.mxu0 0.0
    %98 = vmatpush1.msra.mxu0 0.0
    %99 = vmatprep.subr.mxu0 0.0
    %100 = vmatpush1.msra.mxu0 0.0
    %101 = vmatprep.mubr.f32.mxu0 0.0
    %102 = vmatmul.mubr.f32.gmra.mrb[0].mxu0 %v35
    %v103 = vpop.f32.mrb[0].mxu0
    %v104 = vadd.f32 %v31, %v103
    %v105 = vpop.f32.mrb[0].mxu0
    %106 = vdwg.mxu0
    %v107 = vmax.f32 %v104, 0.0
    %v108 = vld [vmem:[%s3] sm:$0xff]
    %v109 = vld [vmem:[%s3 + $0x8] sm:$0xff]
    %v110 = vld [vmem:[%s3 + $0x10] sm:$0xff]
    %v111 = vld [vmem:[%s3 + $0x18] sm:$0xff]
    %v112 = vld [vmem:[%s3 + $0x20] sm:$0xff]
    %v113 = vld [vmem:[%s3 + $0x28] sm:$0xff]
    %v114 = vld [vmem:[%s3 + $0x30] sm:$0xff]
    %v115 = vld [vmem:[%s3 + $0x38] sm:$0xff]
    %v116 = vld [vmem:[%s4] sm:$0x1]
    %v118 = vlaneseq
    %v119 = vshrl.u32 %v118, 7
    %v120 = vsub.s32 0, %v119
    %v121 = vrot.slane %v116, %v120
    %vm123 = vcmask 523264
    %v125 = vsel %vm123, %v107, 0
    %127 = vmatprep.subr.mxu0 0.0
    %128 = vmatpush1.msra.mxu0 %v108
    %129 = vmatprep.subr.mxu0 0.0
    %130 = vmatpush1.msra.mxu0 %v109
    %131 = vmatprep.subr.mxu0 0.0
    %132 = vmatpush1.msra.mxu0 %v110
    %133 = vmatprep.subr.mxu0 0.0
    %134 = vmatpush1.msra.mxu0 %v111
    %135 = vmatprep.subr.mxu0 0.0
    %136 = vmatpush1.msra.mxu0 %v112
    %137 = vmatprep.subr.mxu0 0.0
    %138 = vmatpush1.msra.mxu0 %v113
    %139 = vmatprep.subr.mxu0 0.0
    %140 = vmatpush1.msra.mxu0 %v114
    %141 = vmatprep.subr.mxu0 0.0
    %142 = vmatpush1.msra.mxu0 %v115
    %143 = vmatprep.subr.mxu0 0.0
    %144 = vmatpush1.msra.mxu0 0.0
    %145 = vmatprep.subr.mxu0 0.0
    %146 = vmatpush1.msra.mxu0 0.0
    %147 = vmatprep.subr.mxu0 0.0
    %148 = vmatpush1.msra.mxu0 0.0
    %149 = vmatprep.subr.mxu0 0.0
    %150 = vmatpush1.msra.mxu0 0.0
    %151 = vmatprep.subr.mxu0 0.0
    %152 = vmatpush1.msra.mxu0 0.0
    %153 = vmatprep.subr.mxu0 0.0
    %154 = vmatpush1.msra.mxu0 0.0
    %155 = vmatprep.subr.mxu0 0.0
    %156 = vmatpush1.msra.mxu0 0.0
    %157 = vmatprep.subr.mxu0 0.0
    %158 = vmatpush1.msra.mxu0 0.0
    %159 = vmatprep.subr.mxu0 0.0
    %160 = vmatpush1.msra.mxu0 0.0
    %161 = vmatprep.subr.mxu0 0.0
    %162 = vmatpush1.msra.mxu0 0.0
    %163 = vmatprep.subr.mxu0 0.0
    %164 = vmatpush1.msra.mxu0 0.0
    %165 = vmatprep.subr.mxu0 0.0
    %166 = vmatpush1.msra.mxu0 0.0
    %167 = vmatprep.subr.mxu0 0.0
    %168 = vmatpush1.msra.mxu0 0.0
    %169 = vmatprep.subr.mxu0 0.0
    %170 = vmatpush1.msra.mxu0 0.0
    %171 = vmatprep.subr.mxu0 0.0
    %172 = vmatpush1.msra.mxu0 0.0
    %173 = vmatprep.subr.mxu0 0.0
    %174 = vmatpush1.msra.mxu0 0.0
    %175 = vmatprep.subr.mxu0 0.0
    %176 = vmatpush1.msra.mxu0 0.0
    %177 = vmatprep.subr.mxu0 0.0
    %178 = vmatpush1.msra.mxu0 0.0
    %179 = vmatprep.subr.mxu0 0.0
    %180 = vmatpush1.msra.mxu0 0.0
    %181 = vmatprep.subr.mxu0 0.0
    %182 = vmatpush1.msra.mxu0 0.0
    %183 = vmatprep.subr.mxu0 0.0
    %184 = vmatpush1.msra.mxu0 0.0
    %185 = vmatprep.subr.mxu0 0.0
    %186 = vmatpush1.msra.mxu0 0.0
    %187 = vmatprep.subr.mxu0 0.0
    %188 = vmatpush1.msra.mxu0 0.0
    %189 = vmatprep.subr.mxu0 0.0
    %190 = vmatpush1.msra.mxu0 0.0
    %191 = vmatprep.mubr.f32.mxu0 0.0
    %192 = vmatmul.mubr.f32.gmra.mrb[0].mxu0 %v125
    %v193 = vpop.f32.mrb[0].mxu0
    %v194 = vadd.f32 %v121, %v193
    %v195 = vpop.f32.mrb[0].mxu0
    %196 = vdwg.mxu0
    %vm197 = vcmask 60416
    %198 = vst.msk [vmem:[#allocation2] sm:$0xf] %vm197, %v194
    // Predicated region
    $region22: #{mlp_classifier.1} parent=1 // pred_check
      _
    $region23: #{mlp_classifier.1} parent=1 // pred_check_branch
      %200 = sbr.rel (0) target = $region25
    $region24: #{mlp_classifier.1} parent=1 // pred_region
      %s202 = ssub.s32 64, 64
      %203 = vsyncadd [#allocation3], %s202
      %s205 = sshll.u32 [#allocation2], 4
      %s206 = int_to_ptr.vmem [resolvable:$true] %s205
      %208 = dma.vmem_to_hbm [thread:$0]  %s206, 64, %s5, [#allocation3]
    $region25: #{mlp_classifier.1} parent=1 // pred_fallthru
      _
    // Predicated region
    $region26: #{mlp_classifier.1} parent=1 // pred_check
      _
    $region27: #{mlp_classifier.1} parent=1 // pred_check_branch
      %210 = sbr.rel (0) target = $region29
    $region28: #{mlp_classifier.1} parent=1 // pred_region
      %211 = dma.done [#allocation3], 64
    $region29: #{mlp_classifier.1} parent=1 // pred_fallthru
      _
    %212 = vsyncpa [#allocation3], 1

</llo_original>
